<compile_context>
chip_gen: v7x
topology: tpu7x:2x2x1
jax: 0.10.0
libtpu: 0.0.40
codegen_flags: <defaults>
</compile_context>

<pallas_src>
import functools

import jax
import jax.numpy as jnp
from jax.experimental import pallas as pl
from jax.experimental.pallas import tpu as pltpu


def _round_up(n, m):
    return ((n + m - 1) // m) * m


def _pad2d(a, rows, cols, dtype):
    """Zero-pad a 2-D array up to (rows, cols) and cast to dtype."""
    a = a.astype(dtype)
    return jnp.pad(a, ((0, rows - a.shape[0]), (0, cols - a.shape[1])))


def _mlp_kernel(x_ref, w1_ref, b1_ref, w2_ref, b2_ref, w3_ref, b3_ref, o_ref):
    """Fused 3-layer MLP on one (TB, D0) batch tile, entirely in VMEM.

    x_ref : (TB, D0)        f32 activations (cast to bf16 here, on the VPU)
    wK    : (Kin, Koutp)    bf16 weights, bK : (1, Koutp) f32 biases (pre-padded)
    o_ref : (TB, D3p)       bf16 output logits (lane-dense, padded to 128)
    """
    x = x_ref[...].astype(jnp.bfloat16)  # f32 -> bf16 in-kernel; hidden under DMA

    # Layer 1: Linear -> ReLU -> Dropout(p=0.0) == identity
    h1 = jnp.dot(x, w1_ref[...], preferred_element_type=jnp.float32) + b1_ref[...]
    h1 = jnp.maximum(h1, 0.0).astype(jnp.bfloat16)

    # Layer 2: Linear -> ReLU -> Dropout(p=0.0) == identity
    h2 = jnp.dot(h1, w2_ref[...], preferred_element_type=jnp.float32) + b2_ref[...]
    h2 = jnp.maximum(h2, 0.0).astype(jnp.bfloat16)

    # Output layer: Linear only (no activation, no dropout)
    out = jnp.dot(h2, w3_ref[...], preferred_element_type=jnp.float32) + b3_ref[...]
    o_ref[...] = out.astype(o_ref.dtype)


def prepare_mlp_params(params):
    """One-time (hoisted out of the forward path) pad + bf16 cast of weights/biases.

    Hidden/output feature dims are zero-padded to multiples of 128 (200->256,
    100->128, 2->128) so every matmul output and the final store are lane-dense.
    Zero padding is exact: padded h columns are relu(0 + 0) = 0 and the matching
    padded weight rows are 0.
    """
    (w1, b1), (w2, b2), (w3, b3) = params
    D0, D1 = w1.shape
    D2 = w2.shape[1]
    D3 = w3.shape[1]
    D1p, D2p, D3p = (_round_up(d, 128) for d in (D1, D2, D3))
    padded = (
        _pad2d(w1, D0, D1p, jnp.bfloat16),
        _pad2d(b1.reshape(1, -1), 1, D1p, jnp.float32),
        _pad2d(w2, D1p, D2p, jnp.bfloat16),
        _pad2d(b2.reshape(1, -1), 1, D2p, jnp.float32),
        _pad2d(w3, D2p, D3p, jnp.bfloat16),
        _pad2d(b3.reshape(1, -1), 1, D3p, jnp.float32),
    )
    dims = (D0, D1, D2, D3, D1p, D2p, D3p)
    return padded, dims


def mlp_block_forward(x_nchw, prepared, *, tb_max=1024):
    """Forward pass of MLPBlock. x_nchw: (B, C, H, W) float32. Returns (B, 2) f32."""
    padded, dims = prepared
    D0, D1, D2, D3, D1p, D2p, D3p = dims
    w1p, b1p, w2p, b2p, w3p, b3p = padded

    B = x_nchw.shape[0]
    # Glue: flatten exactly like x.view(x.size(0), -1) (metadata-only reshape).
    x = x_nchw.reshape(B, -1)
    assert x.shape[1] == D0, f"flattened dim {x.shape[1]} != {D0}"

    # --- Batch tiling --------------------------------------------------------
    # Right-size the tile: smallest tile count covering B with <= tb_max rows
    # each (bounds padding waste), and >= 2 grid steps when there is enough work
    # so the "parallel" axis shards across v7x's two TensorCores (negligible cost
    # on single-TC v5e/v6e).
    B8 = _round_up(B, 8)
    min_steps = 2 if B8 >= 16 else 1
    n_tiles = max(pl.cdiv(B8, tb_max), min_steps)
    TB = _round_up(pl.cdiv(B8, n_tiles), 8)
    Bp = _round_up(B, TB)
    grid = (Bp // TB,)

    # Only a small row pad (< TB rows); no column padding, no dtype cast on x.
    if Bp != B:
        x = jnp.pad(x, ((0, Bp - B), (0, 0)))

    full = lambda i: (0, 0)  # weights/biases: same (whole) block for every grid step

    flops = 2 * Bp * (D0 * D1p + D1p * D2p + D2p * D3p)
    bytes_accessed = (
        Bp * D0 * 4                                          # x stream (f32)
        + sum(int(a.size) * a.dtype.itemsize for a in padded)  # weights / biases
        + Bp * D3p * 2                                        # bf16 output slab
    )

    compiler_kwargs = dict(dimension_semantics=("parallel",))
    if TB > 1024:
        # Large tiles approach v5e's 16 MiB scoped-VMEM default; raise it (still
        # well under physical VMEM on every generation, incl. v7x's 64 MiB).
        compiler_kwargs["vmem_limit_bytes"] = 32 << 20

    out_padded = pl.pallas_call(
        _mlp_kernel,
        out_shape=jax.ShapeDtypeStruct((Bp, D3p), jnp.bfloat16),
        grid=grid,
        in_specs=[
            pl.BlockSpec((TB, D0), lambda i: (i, 0)),        # x tile: f32, streamed
            pl.BlockSpec((D0, D1p), full), pl.BlockSpec((1, D1p), full),
            pl.BlockSpec((D1p, D2p), full), pl.BlockSpec((1, D2p), full),
            pl.BlockSpec((D2p, D3p), full), pl.BlockSpec((1, D3p), full),
        ],
        out_specs=pl.BlockSpec((TB, D3p), lambda i: (i, 0)),
        compiler_params=pltpu.CompilerParams(**compiler_kwargs),
        cost_estimate=pl.CostEstimate(
            flops=flops, transcendentals=0, bytes_accessed=bytes_accessed),
    )(x, w1p, b1p, w2p, b2p, w3p, b3p)

    # Drop batch/feature padding; cast the tiny (B, 2) result back to f32 logits.
    return out_padded[:B, :D3].astype(jnp.float32)


def init_mlp_params(key, layers_sizes=(392, 200, 100, 2)):
    """Deterministic init mimicking PyTorch nn.Linear default (U(-k, k), k=1/sqrt(fan_in)).

    Weights are stored as (in_features, out_features) for the kernel's x @ W layout.
    Biases are stored as (1, out_features).
    """
    params = []
    for idx in range(len(layers_sizes) - 1):
        fan_in, fan_out = layers_sizes[idx], layers_sizes[idx + 1]
        key, kw, kb = jax.random.split(key, 3)
        bound = 1.0 / (fan_in ** 0.5)
        w = jax.random.uniform(kw, (fan_in, fan_out), jnp.float32, -bound, bound)
        b = jax.random.uniform(kb, (1, fan_out), jnp.float32, -bound, bound)
        params.append((w, b))
    return params


def mlp_reference(x_nchw, params, *, matmul_dtype=jnp.float32):
    """Pure-JAX reference of the same forward pass (optionally with bf16 matmul inputs)."""
    (w1, b1), (w2, b2), (w3, b3) = params
    x = x_nchw.reshape(x_nchw.shape[0], -1)
    c = lambda a: a.astype(matmul_dtype)
    h = jnp.maximum(jnp.dot(c(x), c(w1), preferred_element_type=jnp.float32) + b1, 0.0)
    h = jnp.maximum(jnp.dot(c(h), c(w2), preferred_element_type=jnp.float32) + b2, 0.0)
    return jnp.dot(c(h), c(w3), preferred_element_type=jnp.float32) + b3


if __name__ == "__main__":
    key = jax.random.PRNGKey(0)
    key, kx = jax.random.split(key)

    # Small input consistent with the module: flattens to 392 = 2 * 14 * 14.
    B, C, H, W = 2, 2, 14, 14
    x = jax.random.normal(kx, (B, C, H, W), jnp.float32)

    params = init_mlp_params(key, layers_sizes=(392, 200, 100, 2))
    prepared = prepare_mlp_params(params)  # one-time pad/cast, hoisted out of forward

    fwd = jax.jit(lambda xx: mlp_block_forward(xx, prepared))
    out = jax.block_until_ready(fwd(x))
    assert out.shape == (B, 2), out.shape

    # Tight check vs a reference mirroring the kernel's bf16-input / f32-accum math
    # (reference output also rounded to bf16 to match the kernel's output store).
    ref_bf16 = mlp_reference(x, params, matmul_dtype=jnp.bfloat16)
    ref_bf16 = ref_bf16.astype(jnp.bfloat16).astype(jnp.float32)
    assert jnp.allclose(out, ref_bf16, atol=1e-2, rtol=1e-2), "mismatch vs bf16 reference"

    # Loose check vs the full-f32 reference (difference is bf16 rounding only).
    ref_f32 = mlp_reference(x, params, matmul_dtype=jnp.float32)
    assert jnp.allclose(out, ref_f32, atol=5e-2, rtol=5e-2), "mismatch vs f32 reference"

    print("KERNEL_OK")
</pallas_src>

<mosaic_0001>
module attributes {stable_mosaic.version = 11 : i64} {
  func.func @_mlp_kernel(%arg0: i32, %arg1: memref<8x392xf32, #tpu.memory_space<vmem>>, %arg2: memref<392x256xbf16, #tpu.memory_space<vmem>>, %arg3: memref<1x256xf32, #tpu.memory_space<vmem>>, %arg4: memref<256x128xbf16, #tpu.memory_space<vmem>>, %arg5: memref<1x128xf32, #tpu.memory_space<vmem>>, %arg6: memref<128x128xbf16, #tpu.memory_space<vmem>>, %arg7: memref<1x128xf32, #tpu.memory_space<vmem>>, %arg8: memref<8x128xbf16, #tpu.memory_space<vmem>>) attributes {dimension_semantics = [#tpu.dimension_semantics<parallel>], iteration_bounds = array<i64: 1>, scalar_prefetch = 0 : i64, scratch_operands = 0 : i64, tpu.core_type = #tpu.core_type<tc>, window_params = [{transform_indices = @transform_0, window_bounds = array<i64: 8, 392>}, {pipeline_mode = #tpu.pipeline_mode<synchronous>, transform_indices = @transform_1, window_bounds = array<i64: 392, 256>}, {pipeline_mode = #tpu.pipeline_mode<synchronous>, transform_indices = @transform_2, window_bounds = array<i64: 1, 256>}, {pipeline_mode = #tpu.pipeline_mode<synchronous>, transform_indices = @transform_3, window_bounds = array<i64: 256, 128>}, {pipeline_mode = #tpu.pipeline_mode<synchronous>, transform_indices = @transform_4, window_bounds = array<i64: 1, 128>}, {pipeline_mode = #tpu.pipeline_mode<synchronous>, transform_indices = @transform_5, window_bounds = array<i64: 128, 128>}, {pipeline_mode = #tpu.pipeline_mode<synchronous>, transform_indices = @transform_6, window_bounds = array<i64: 1, 128>}, {transform_indices = @transform_7, window_bounds = array<i64: 8, 128>}]} {
    %c0 = arith.constant 0 : index
    %c0_0 = arith.constant 0 : index
    %0 = vector.load %arg1[%c0, %c0_0] : memref<8x392xf32, #tpu.memory_space<vmem>>, vector<8x392xf32>
    %1 = arith.truncf %0 : vector<8x392xf32> to vector<8x392xbf16>
    %c0_1 = arith.constant 0 : index
    %c0_2 = arith.constant 0 : index
    %2 = vector.load %arg2[%c0_1, %c0_2] : memref<392x256xbf16, #tpu.memory_space<vmem>>, vector<392x256xbf16>
    %cst = arith.constant dense<0.000000e+00> : vector<8x256xf32>
    %3 = tpu.matmul %1, %2, %cst {dimension_numbers = #tpu.dot_dimension_numbers<[1], [0], [0], [1], [0, 0, 1, 1], [], []>} : vector<8x392xbf16>, vector<392x256xbf16>, vector<8x256xf32> -> vector<8x256xf32>
    %c0_3 = arith.constant 0 : index
    %c0_4 = arith.constant 0 : index
    %4 = vector.load %arg3[%c0_3, %c0_4] : memref<1x256xf32, #tpu.memory_space<vmem>>, vector<1x256xf32>
    %5 = vector.broadcast %4 : vector<1x256xf32> to vector<8x256xf32>
    %6 = arith.addf %3, %5 : vector<8x256xf32>
    %cst_5 = arith.constant 0.000000e+00 : f32
    %7 = vector.broadcast %cst_5 : f32 to vector<8x256xf32>
    %8 = arith.maximumf %6, %7 : vector<8x256xf32>
    %9 = arith.truncf %8 : vector<8x256xf32> to vector<8x256xbf16>
    %c0_6 = arith.constant 0 : index
    %c0_7 = arith.constant 0 : index
    %10 = vector.load %arg4[%c0_6, %c0_7] : memref<256x128xbf16, #tpu.memory_space<vmem>>, vector<256x128xbf16>
    %cst_8 = arith.constant dense<0.000000e+00> : vector<8x128xf32>
    %11 = tpu.matmul %9, %10, %cst_8 {dimension_numbers = #tpu.dot_dimension_numbers<[1], [0], [0], [1], [0, 0, 1, 1], [], []>} : vector<8x256xbf16>, vector<256x128xbf16>, vector<8x128xf32> -> vector<8x128xf32>
    %c0_9 = arith.constant 0 : index
    %c0_10 = arith.constant 0 : index
    %12 = vector.load %arg5[%c0_9, %c0_10] : memref<1x128xf32, #tpu.memory_space<vmem>>, vector<1x128xf32>
    %13 = vector.broadcast %12 : vector<1x128xf32> to vector<8x128xf32>
    %14 = arith.addf %11, %13 : vector<8x128xf32>
    %cst_11 = arith.constant 0.000000e+00 : f32
    %15 = vector.broadcast %cst_11 : f32 to vector<8x128xf32>
    %16 = arith.maximumf %14, %15 : vector<8x128xf32>
    %17 = arith.truncf %16 : vector<8x128xf32> to vector<8x128xbf16>
    %c0_12 = arith.constant 0 : index
    %c0_13 = arith.constant 0 : index
    %18 = vector.load %arg6[%c0_12, %c0_13] : memref<128x128xbf16, #tpu.memory_space<vmem>>, vector<128x128xbf16>
    %cst_14 = arith.constant dense<0.000000e+00> : vector<8x128xf32>
    %19 = tpu.matmul %17, %18, %cst_14 {dimension_numbers = #tpu.dot_dimension_numbers<[1], [0], [0], [1], [0, 0, 1, 1], [], []>} : vector<8x128xbf16>, vector<128x128xbf16>, vector<8x128xf32> -> vector<8x128xf32>
    %c0_15 = arith.constant 0 : index
    %c0_16 = arith.constant 0 : index
    %20 = vector.load %arg7[%c0_15, %c0_16] : memref<1x128xf32, #tpu.memory_space<vmem>>, vector<1x128xf32>
    %21 = vector.broadcast %20 : vector<1x128xf32> to vector<8x128xf32>
    %22 = arith.addf %19, %21 : vector<8x128xf32>
    %23 = arith.truncf %22 : vector<8x128xf32> to vector<8x128xbf16>
    %c0_17 = arith.constant 0 : index
    %c0_18 = arith.constant 0 : index
    %24 = vector.load %arg8[%c0_17, %c0_18] : memref<8x128xbf16, #tpu.memory_space<vmem>>, vector<8x128xbf16>
    tpu.vector_store %arg8[%c0_17, %c0_18], %23 {strides = array<i32>} : memref<8x128xbf16, #tpu.memory_space<vmem>>, vector<8x128xbf16>,
    return
  }
  func.func @transform_0(%arg0: i32) -> (i32, i32) {
    %c0_i32 = arith.constant 0 : i32
    %c0_i32_0 = arith.constant 0 : i32
    return %arg0, %c0_i32 : i32, i32
  }
  func.func @transform_1(%arg0: i32) -> (i32, i32) {
    %c0_i32 = arith.constant 0 : i32
    %c0_i32_0 = arith.constant 0 : i32
    %c0_i32_1 = arith.constant 0 : i32
    return %c0_i32, %c0_i32_0 : i32, i32
  }
  func.func @transform_2(%arg0: i32) -> (i32, i32) {
    %c0_i32 = arith.constant 0 : i32
    %c0_i32_0 = arith.constant 0 : i32
    %c0_i32_1 = arith.constant 0 : i32
    return %c0_i32, %c0_i32_0 : i32, i32
  }
  func.func @transform_3(%arg0: i32) -> (i32, i32) {
    %c0_i32 = arith.constant 0 : i32
    %c0_i32_0 = arith.constant 0 : i32
    %c0_i32_1 = arith.constant 0 : i32
    return %c0_i32, %c0_i32_0 : i32, i32
  }
  func.func @transform_4(%arg0: i32) -> (i32, i32) {
    %c0_i32 = arith.constant 0 : i32
    %c0_i32_0 = arith.constant 0 : i32
    %c0_i32_1 = arith.constant 0 : i32
    return %c0_i32, %c0_i32_0 : i32, i32
  }
  func.func @transform_5(%arg0: i32) -> (i32, i32) {
    %c0_i32 = arith.constant 0 : i32
    %c0_i32_0 = arith.constant 0 : i32
    %c0_i32_1 = arith.constant 0 : i32
    return %c0_i32, %c0_i32_0 : i32, i32
  }
  func.func @transform_6(%arg0: i32) -> (i32, i32) {
    %c0_i32 = arith.constant 0 : i32
    %c0_i32_0 = arith.constant 0 : i32
    %c0_i32_1 = arith.constant 0 : i32
    return %c0_i32, %c0_i32_0 : i32, i32
  }
  func.func @transform_7(%arg0: i32) -> (i32, i32) {
    %c0_i32 = arith.constant 0 : i32
    %c0_i32_0 = arith.constant 0 : i32
    return %arg0, %c0_i32 : i32, i32
  }
}

</mosaic_0001>

<llo_original>
// kernel: _lambda_.1
$region0: #{_lambda_.1}
  #allocation0 [shape = 'u32[]', space=smem, size = 0x4, offset = 0x4, fixed_abs, tag = 'smem constant byte address 0x4 - core index']
  #allocation1 [shape = 'u32[144,128]{1,0:T(1,128)}', space=vmem, size = 0x12000, scoped, tag = 'internal scratch']
  %s0 = inlined_call_operand.vmem [shape: f32[8,392], index: 0, kind: input, shape index: {}]
  %s1 = inlined_call_operand.hbm [shape: bf16[392,256], index: 1, kind: input, shape index: {}]
  %s2 = inlined_call_operand.vmem [shape: f32[1,256], index: 2, kind: input, shape index: {}]
  %s3 = inlined_call_operand.vmem [shape: bf16[256,128], index: 3, kind: input, shape index: {}]
  %s4 = inlined_call_operand.vmem [shape: f32[1,128], index: 4, kind: input, shape index: {}]
  %s5 = inlined_call_operand.vmem [shape: bf16[128,128], index: 5, kind: input, shape index: {}]
  %s6 = inlined_call_operand.vmem [shape: f32[1,128], index: 6, kind: input, shape index: {}]
  %s7 = inlined_call_operand.vmem [shape: bf16[8,128], index: 7, kind: output, shape index: {}]
  %s8 = sld [smem:[#allocation0]]
  $region42: #{_lambda_.1} parent=0
    _
  %s10 = ssub.s32 1, %s8
  %s11 = scalar_select 0, %s10, %s8
  $region1: #{_lambda_.1} parent=0
    #allocation2 [shape = 'u8[200704]{0}', space=vmem, size = 0x31000, scoped, tag = 'input window, operand 1, single buffered']
    #allocation3 [shape = 's32[1]{0}', space=sflag, size = 0x4, scoped, tag = 'scoped memory for _lambda_.1']
    %12 = vsyncpa [#allocation3], 0
    // Predicated region
    $region2: #{_lambda_.1} parent=1 // pred_check
      _
    $region3: #{_lambda_.1} parent=1 // pred_check_branch
      %14 = sbr.rel (0) target = $region5
    $region4: #{_lambda_.1} parent=1 // pred_region
      _
    $region5: #{_lambda_.1} parent=1 // pred_fallthru
      _
    // Predicated region
    $region6: #{_lambda_.1} parent=1 // pred_check
      _
    $region7: #{_lambda_.1} parent=1 // pred_check_branch
      %16 = sbr.rel (0) target = $region9
    $region8: #{_lambda_.1} parent=1 // pred_region
      %s18 = ssub.s32 6272, 6272
      %19 = vsyncadd [#allocation3], %s18
      %s20 = sshll.u32 [#allocation2], 4
      %s21 = int_to_ptr.vmem [resolvable:$true] %s20
      %26 = dma.hbm_to_vmem [thread:$0]  %s1, 6272, %s21, [#allocation3], 128, 128, 8
    $region9: #{_lambda_.1} parent=1 // pred_fallthru
      _
    // Predicated region
    $region10: #{_lambda_.1} parent=1 // pred_check
      _
    $region11: #{_lambda_.1} parent=1 // pred_check_branch
      %28 = sbr.rel (0) target = $region13
    $region12: #{_lambda_.1} parent=1 // pred_region
      _
    $region13: #{_lambda_.1} parent=1 // pred_fallthru
      _
    // Predicated region
    $region14: #{_lambda_.1} parent=1 // pred_check
      _
    $region15: #{_lambda_.1} parent=1 // pred_check_branch
      %30 = sbr.rel (0) target = $region17
    $region16: #{_lambda_.1} parent=1 // pred_region
      _
    $region17: #{_lambda_.1} parent=1 // pred_fallthru
      _
    // Predicated region
    $region18: #{_lambda_.1} parent=1 // pred_check
      _
    $region19: #{_lambda_.1} parent=1 // pred_check_branch
      %32 = sbr.rel (0) target = $region21
    $region20: #{_lambda_.1} parent=1 // pred_region
      _
    $region21: #{_lambda_.1} parent=1 // pred_fallthru
      _
    // Predicated region
    $region22: #{_lambda_.1} parent=1 // pred_check
      _
    $region23: #{_lambda_.1} parent=1 // pred_check_branch
      %34 = sbr.rel (0) target = $region25
    $region24: #{_lambda_.1} parent=1 // pred_region
      _
    $region25: #{_lambda_.1} parent=1 // pred_fallthru
      _
    // Predicated region
    $region26: #{_lambda_.1} parent=1 // pred_check
      _
    $region27: #{_lambda_.1} parent=1 // pred_check_branch
      %36 = sbr.rel (0) target = $region29
    $region28: #{_lambda_.1} parent=1 // pred_region
      _
    $region29: #{_lambda_.1} parent=1 // pred_fallthru
      _
    // Predicated region
    $region30: #{_lambda_.1} parent=1 // pred_check
      _
    $region31: #{_lambda_.1} parent=1 // pred_check_branch
      %38 = sbr.rel (0) target = $region33
    $region32: #{_lambda_.1} parent=1 // pred_region
      %39 = dma.done [#allocation3], 6272
    $region33: #{_lambda_.1} parent=1 // pred_fallthru
      _
    %v41 = vld [vmem:[%s0] sm:$0xff]
    %v42 = vld [vmem:[%s0 + $0x8] sm:$0xff]
    %v43 = vld [vmem:[%s0 + $0x10] sm:$0xff]
    %v44 = vld [vmem:[%s0 + $0x18] sm:$0xff]
    %v45 = vpack.c.bf16 %v41, %v41
    %v46 = vpack.c.bf16 %v42, %v42
    %v47 = vpack.c.bf16 %v43, %v43
    %v48 = vpack.c.bf16 %v44, %v44
    %v49 = vld [vmem:[#allocation2] sm:$0xff]
    %v50 = vld [vmem:[#allocation2 + $0x8] sm:$0xff]
    %v51 = vld [vmem:[#allocation2 + $0x10] sm:$0xff]
    %v52 = vld [vmem:[#allocation2 + $0x18] sm:$0xff]
    %v53 = vld [vmem:[#allocation2 + $0x20] sm:$0xff]
    %v54 = vld [vmem:[#allocation2 + $0x28] sm:$0xff]
    %v55 = vld [vmem:[#allocation2 + $0x30] sm:$0xff]
    %v56 = vld [vmem:[#allocation2 + $0x38] sm:$0xff]
    %v57 = vld [vmem:[#allocation2 + $0x40] sm:$0xff]
    %v58 = vld [vmem:[#allocation2 + $0x48] sm:$0xff]
    %v59 = vld [vmem:[#allocation2 + $0x50] sm:$0xff]
    %v60 = vld [vmem:[#allocation2 + $0x58] sm:$0xff]
    %v61 = vld [vmem:[#allocation2 + $0x60] sm:$0xff]
    %v62 = vld [vmem:[#allocation2 + $0x68] sm:$0xff]
    %v63 = vld [vmem:[#allocation2 + $0x70] sm:$0xff]
    %v64 = vld [vmem:[#allocation2 + $0x78] sm:$0xff]
    %v65 = vld [vmem:[#allocation2 + $0x80] sm:$0xff]
    %v66 = vld [vmem:[#allocation2 + $0x88] sm:$0xff]
    %v67 = vld [vmem:[#allocation2 + $0x90] sm:$0xff]
    %v68 = vld [vmem:[#allocation2 + $0x98] sm:$0xff]
    %v69 = vld [vmem:[#allocation2 + $0xa0] sm:$0xff]
    %v70 = vld [vmem:[#allocation2 + $0xa8] sm:$0xff]
    %v71 = vld [vmem:[#allocation2 + $0xb0] sm:$0xff]
    %v72 = vld [vmem:[#allocation2 + $0xb8] sm:$0xff]
    %v73 = vld [vmem:[#allocation2 + $0xc0] sm:$0xff]
    %v74 = vld [vmem:[#allocation2 + $0xc8] sm:$0xff]
    %v75 = vld [vmem:[#allocation2 + $0xd0] sm:$0xff]
    %v76 = vld [vmem:[#allocation2 + $0xd8] sm:$0xff]
    %v77 = vld [vmem:[#allocation2 + $0xe0] sm:$0xff]
    %v78 = vld [vmem:[#allocation2 + $0xe8] sm:$0xff]
    %v79 = vld [vmem:[#allocation2 + $0xf0] sm:$0xff]
    %v80 = vld [vmem:[#allocation2 + $0xf8] sm:$0xff]
    %v81 = vld [vmem:[#allocation2 + $0x100] sm:$0xff]
    %v82 = vld [vmem:[#allocation2 + $0x108] sm:$0xff]
    %v83 = vld [vmem:[#allocation2 + $0x110] sm:$0xff]
    %v84 = vld [vmem:[#allocation2 + $0x118] sm:$0xff]
    %v85 = vld [vmem:[#allocation2 + $0x120] sm:$0xff]
    %v86 = vld [vmem:[#allocation2 + $0x128] sm:$0xff]
    %v87 = vld [vmem:[#allocation2 + $0x130] sm:$0xff]
    %v88 = vld [vmem:[#allocation2 + $0x138] sm:$0xff]
    %v89 = vld [vmem:[#allocation2 + $0x140] sm:$0xff]
    %v90 = vld [vmem:[#allocation2 + $0x148] sm:$0xff]
    %v91 = vld [vmem:[#allocation2 + $0x150] sm:$0xff]
    %v92 = vld [vmem:[#allocation2 + $0x158] sm:$0xff]
    %v93 = vld [vmem:[#allocation2 + $0x160] sm:$0xff]
    %v94 = vld [vmem:[#allocation2 + $0x168] sm:$0xff]
    %v95 = vld [vmem:[#allocation2 + $0x170] sm:$0xff]
    %v96 = vld [vmem:[#allocation2 + $0x178] sm:$0xff]
    %v97 = vld [vmem:[#allocation2 + $0x180] sm:$0xff]
    %v98 = vld [vmem:[%s2] sm:$0x3]
    %v100 = vlaneseq
    %v101 = vshrl.u32 %v100, 7
    %v102 = vsub.s32 0, %v101
    %v103 = vrot.slane %v98, %v102
    %v104 = vlaneseq
    %v105 = vshrl.u32 %v104, 7
    %v106 = vsub.s32 1, %v105
    %v107 = vrot.slane %v98, %v106
    %v159 = vunpack.c.l.b16 %v49
    %v160 = vunpack.c.h.b16 %v49
    %v161 = vunpack.c.l.b16 %v50
    %v162 = vunpack.c.h.b16 %v50
    %v163 = vunpack.c.l.b16 %v51
    %v164 = vunpack.c.h.b16 %v51
    %v165 = vunpack.c.l.b16 %v52
    %v166 = vunpack.c.h.b16 %v52
    %v167 = vunpack.c.l.b16 %v53
    %v168 = vunpack.c.h.b16 %v53
    %v169 = vunpack.c.l.b16 %v54
    %v170 = vunpack.c.h.b16 %v54
    %v171 = vunpack.c.l.b16 %v55
    %v172 = vunpack.c.h.b16 %v55
    %v173 = vunpack.c.l.b16 %v56
    %v174 = vunpack.c.h.b16 %v56
    %v175 = vunpack.c.l.b16 %v57
    %v176 = vunpack.c.h.b16 %v57
    %v177 = vunpack.c.l.b16 %v58
    %v178 = vunpack.c.h.b16 %v58
    %v179 = vunpack.c.l.b16 %v59
    %v180 = vunpack.c.h.b16 %v59
    %v181 = vunpack.c.l.b16 %v60
    %v182 = vunpack.c.h.b16 %v60
    %v183 = vunpack.c.l.b16 %v61
    %v184 = vunpack.c.h.b16 %v61
    %v185 = vunpack.c.l.b16 %v62
    %v186 = vunpack.c.h.b16 %v62
    %v187 = vunpack.c.l.b16 %v63
    %v188 = vunpack.c.h.b16 %v63
    %v189 = vunpack.c.l.b16 %v64
    %v190 = vunpack.c.h.b16 %v64
    %v191 = vunpack.c.l.b16 %v65
    %v192 = vunpack.c.h.b16 %v65
    %v193 = vunpack.c.l.b16 %v66
    %v194 = vunpack.c.h.b16 %v66
    %v195 = vunpack.c.l.b16 %v67
    %v196 = vunpack.c.h.b16 %v67
    %v197 = vunpack.c.l.b16 %v68
    %v198 = vunpack.c.h.b16 %v68
    %v199 = vunpack.c.l.b16 %v69
    %v200 = vunpack.c.h.b16 %v69
    %v201 = vunpack.c.l.b16 %v70
    %v202 = vunpack.c.h.b16 %v70
    %v203 = vunpack.c.l.b16 %v71
    %v204 = vunpack.c.h.b16 %v71
    %v205 = vunpack.c.l.b16 %v72
    %v206 = vunpack.c.h.b16 %v72
    %v207 = vunpack.c.l.b16 %v73
    %v208 = vunpack.c.h.b16 %v73
    %v209 = vunpack.c.l.b16 %v74
    %v210 = vunpack.c.h.b16 %v74
    %v211 = vunpack.c.l.b16 %v75
    %v212 = vunpack.c.h.b16 %v75
    %v213 = vunpack.c.l.b16 %v76
    %v214 = vunpack.c.h.b16 %v76
    %v215 = vunpack.c.l.b16 %v77
    %v216 = vunpack.c.h.b16 %v77
    %v217 = vunpack.c.l.b16 %v78
    %v218 = vunpack.c.h.b16 %v78
    %v219 = vunpack.c.l.b16 %v79
    %v220 = vunpack.c.h.b16 %v79
    %v221 = vunpack.c.l.b16 %v80
    %v222 = vunpack.c.h.b16 %v80
    %v223 = vunpack.c.l.b16 %v81
    %v224 = vunpack.c.h.b16 %v81
    %v225 = vunpack.c.l.b16 %v82
    %v226 = vunpack.c.h.b16 %v82
    %v227 = vunpack.c.l.b16 %v83
    %v228 = vunpack.c.h.b16 %v83
    %v229 = vunpack.c.l.b16 %v84
    %v230 = vunpack.c.h.b16 %v84
    %v231 = vunpack.c.l.b16 %v85
    %v232 = vunpack.c.h.b16 %v85
    %v233 = vunpack.c.l.b16 %v86
    %v234 = vunpack.c.h.b16 %v86
    %v235 = vunpack.c.l.b16 %v87
    %v236 = vunpack.c.h.b16 %v87
    %v237 = vunpack.c.l.b16 %v88
    %v238 = vunpack.c.h.b16 %v88
    %v239 = vunpack.c.l.b16 %v89
    %v240 = vunpack.c.h.b16 %v89
    %v241 = vunpack.c.l.b16 %v90
    %v242 = vunpack.c.h.b16 %v90
    %v243 = vunpack.c.l.b16 %v91
    %v244 = vunpack.c.h.b16 %v91
    %v245 = vunpack.c.l.b16 %v92
    %v246 = vunpack.c.h.b16 %v92
    %v247 = vunpack.c.l.b16 %v93
    %v248 = vunpack.c.h.b16 %v93
    %v249 = vunpack.c.l.b16 %v94
    %v250 = vunpack.c.h.b16 %v94
    %v251 = vunpack.c.l.b16 %v95
    %v252 = vunpack.c.h.b16 %v95
    %v253 = vunpack.c.l.b16 %v96
    %v254 = vunpack.c.h.b16 %v96
    %v255 = vunpack.c.l.b16 %v97
    %v256 = vunpack.c.h.b16 %v97
    %v257 = vpack.c.b16 %v161, %v159
    %v258 = vpack.c.b16 %v162, %v160
    %v259 = vpack.c.b16 %v165, %v163
    %v260 = vpack.c.b16 %v166, %v164
    %v261 = vpack.c.b16 %v169, %v167
    %v262 = vpack.c.b16 %v170, %v168
    %v263 = vpack.c.b16 %v173, %v171
    %v264 = vpack.c.b16 %v174, %v172
    %v265 = vpack.c.b16 %v177, %v175
    %v266 = vpack.c.b16 %v178, %v176
    %v267 = vpack.c.b16 %v181, %v179
    %v268 = vpack.c.b16 %v182, %v180
    %v269 = vpack.c.b16 %v185, %v183
    %v270 = vpack.c.b16 %v186, %v184
    %v271 = vpack.c.b16 %v189, %v187
    %v272 = vpack.c.b16 %v190, %v188
    %v273 = vpack.c.b16 %v193, %v191
    %v274 = vpack.c.b16 %v194, %v192
    %v275 = vpack.c.b16 %v197, %v195
    %v276 = vpack.c.b16 %v198, %v196
    %v277 = vpack.c.b16 %v201, %v199
    %v278 = vpack.c.b16 %v202, %v200
    %v279 = vpack.c.b16 %v205, %v203
    %v280 = vpack.c.b16 %v206, %v204
    %v281 = vpack.c.b16 %v209, %v207
    %v282 = vpack.c.b16 %v210, %v208
    %v283 = vpack.c.b16 %v213, %v211
    %v284 = vpack.c.b16 %v214, %v212
    %v285 = vpack.c.b16 %v217, %v215
    %v286 = vpack.c.b16 %v218, %v216
    %v287 = vpack.c.b16 %v221, %v219
    %v288 = vpack.c.b16 %v222, %v220
    %v289 = vpack.c.b16 %v225, %v223
    %v290 = vpack.c.b16 %v226, %v224
    %v291 = vpack.c.b16 %v229, %v227
    %v292 = vpack.c.b16 %v230, %v228
    %v293 = vpack.c.b16 %v233, %v231
    %v294 = vpack.c.b16 %v234, %v232
    %v295 = vpack.c.b16 %v237, %v235
    %v296 = vpack.c.b16 %v238, %v236
    %v297 = vpack.c.b16 %v241, %v239
    %v298 = vpack.c.b16 %v242, %v240
    %v299 = vpack.c.b16 %v245, %v243
    %v300 = vpack.c.b16 %v246, %v244
    %v301 = vpack.c.b16 %v249, %v247
    %v302 = vpack.c.b16 %v250, %v248
    %v303 = vpack.c.b16 %v253, %v251
    %v304 = vpack.c.b16 %v254, %v252
    %v305 = vpack.c.b16 %v255, %v255
    %v306 = vpack.c.b16 %v256, %v256
    %vm355 = vcmask 64512
    %v357 = vsel %vm355, %v48, 0
    %vm359 = vcmask 1043456
    %v361 = vsel %vm359, %v305, 0
    %v364 = vsel %vm359, %v306, 0
    %366 = vmatprep.subr.bf16.mxu0 %v258
    %367 = vmatpush1.bf16.msra.mxu0 %v257
    %368 = vmatprep.subr.bf16.mxu0 %v260
    %369 = vmatpush1.bf16.msra.mxu0 %v259
    %370 = vmatprep.subr.bf16.mxu0 %v262
    %371 = vmatpush1.bf16.msra.mxu0 %v261
    %372 = vmatprep.subr.bf16.mxu0 %v264
    %373 = vmatpush1.bf16.msra.mxu0 %v263
    %374 = vmatprep.subr.bf16.mxu0 %v266
    %375 = vmatpush1.bf16.msra.mxu0 %v265
    %376 = vmatprep.subr.bf16.mxu0 %v268
    %377 = vmatpush1.bf16.msra.mxu0 %v267
    %378 = vmatprep.subr.bf16.mxu0 %v270
    %379 = vmatpush1.bf16.msra.mxu0 %v269
    %380 = vmatprep.subr.bf16.mxu0 %v272
    %381 = vmatpush1.bf16.msra.mxu0 %v271
    %382 = vmatprep.subr.bf16.mxu0 %v274
    %383 = vmatpush1.bf16.msra.mxu0 %v273
    %384 = vmatprep.subr.bf16.mxu0 %v276
    %385 = vmatpush1.bf16.msra.mxu0 %v275
    %386 = vmatprep.subr.bf16.mxu0 %v278
    %387 = vmatpush1.bf16.msra.mxu0 %v277
    %388 = vmatprep.subr.bf16.mxu0 %v280
    %389 = vmatpush1.bf16.msra.mxu0 %v279
    %390 = vmatprep.subr.bf16.mxu0 %v282
    %391 = vmatpush1.bf16.msra.mxu0 %v281
    %392 = vmatprep.subr.bf16.mxu0 %v284
    %393 = vmatpush1.bf16.msra.mxu0 %v283
    %394 = vmatprep.subr.bf16.mxu0 %v286
    %395 = vmatpush1.bf16.msra.mxu0 %v285
    %396 = vmatprep.subr.bf16.mxu0 %v288
    %397 = vmatpush1.bf16.msra.mxu0 %v287
    %398 = vmatprep.mubr.bf16.mxu0 %v46
    %399 = vmatmul.mubr.bf16.gmra.mrb[0].mxu0 %v45
    %v400 = vpop.f32.mrb[0].mxu0
    %v401 = vadd.f32 %v103, %v400
    %v402 = vpop.f32.mrb[0].mxu0
    %v403 = vadd.f32 %v107, %v402
    %v404 = vpop.f32.mrb[0].mxu0
    %v405 = vpop.f32.mrb[0].mxu0
    %406 = vdwg.mxu0
    %407 = vmatprep.subr.bf16.mxu0 %v290
    %408 = vmatpush1.bf16.msra.mxu0 %v289
    %409 = vmatprep.subr.bf16.mxu0 %v292
    %410 = vmatpush1.bf16.msra.mxu0 %v291
    %411 = vmatprep.subr.bf16.mxu0 %v294
    %412 = vmatpush1.bf16.msra.mxu0 %v293
    %413 = vmatprep.subr.bf16.mxu0 %v296
    %414 = vmatpush1.bf16.msra.mxu0 %v295
    %415 = vmatprep.subr.bf16.mxu0 %v298
    %416 = vmatpush1.bf16.msra.mxu0 %v297
    %417 = vmatprep.subr.bf16.mxu0 %v300
    %418 = vmatpush1.bf16.msra.mxu0 %v299
    %419 = vmatprep.subr.bf16.mxu0 %v302
    %420 = vmatpush1.bf16.msra.mxu0 %v301
    %421 = vmatprep.subr.bf16.mxu0 %v304
    %422 = vmatpush1.bf16.msra.mxu0 %v303
    %423 = vmatprep.subr.bf16.mxu0 %v364
    %424 = vmatpush1.bf16.msra.mxu0 %v361
    %425 = vmatprep.subr.bf16.mxu0 0
    %426 = vmatpush1.bf16.msra.mxu0 0
    %427 = vmatprep.subr.bf16.mxu0 0
    %428 = vmatpush1.bf16.msra.mxu0 0
    %429 = vmatprep.subr.bf16.mxu0 0
    %430 = vmatpush1.bf16.msra.mxu0 0
    %431 = vmatprep.subr.bf16.mxu0 0
    %432 = vmatpush1.bf16.msra.mxu0 0
    %433 = vmatprep.subr.bf16.mxu0 0
    %434 = vmatpush1.bf16.msra.mxu0 0
    %435 = vmatprep.subr.bf16.mxu0 0
    %436 = vmatpush1.bf16.msra.mxu0 0
    %437 = vmatprep.subr.bf16.mxu0 0
    %438 = vmatpush1.bf16.msra.mxu0 0
    %439 = vmatprep.mubr.bf16.mxu0 %v357
    %440 = vmatmul.mubr.bf16.gmra.mrb[0].mxu0 %v47
    %v441 = vpop.f32.mrb[0].mxu0
    %v442 = vadd.f32 %v401, %v441
    %v443 = vpop.f32.mrb[0].mxu0
    %v444 = vadd.f32 %v403, %v443
    %v445 = vpop.f32.mrb[0].mxu0
    %v446 = vpop.f32.mrb[0].mxu0
    %447 = vdwg.mxu0
    %v448 = vmax.f32 %v442, 0.0
    %v449 = vmax.f32 %v444, 0.0
    %v450 = vpack.c.bf16 %v448, %v448
    %v451 = vpack.c.bf16 %v449, %v449
    %v452 = vld [vmem:[%s3] sm:$0xf]
    %v453 = vld [vmem:[%s3 + $0x4] sm:$0xf]
    %v454 = vld [vmem:[%s3 + $0x8] sm:$0xf]
    %v455 = vld [vmem:[%s3 + $0xc] sm:$0xf]
    %v456 = vld [vmem:[%s3 + $0x10] sm:$0xf]
    %v457 = vld [vmem:[%s3 + $0x14] sm:$0xf]
    %v458 = vld [vmem:[%s3 + $0x18] sm:$0xf]
    %v459 = vld [vmem:[%s3 + $0x1c] sm:$0xf]
    %v460 = vld [vmem:[%s3 + $0x20] sm:$0xf]
    %v461 = vld [vmem:[%s3 + $0x24] sm:$0xf]
    %v462 = vld [vmem:[%s3 + $0x28] sm:$0xf]
    %v463 = vld [vmem:[%s3 + $0x2c] sm:$0xf]
    %v464 = vld [vmem:[%s3 + $0x30] sm:$0xf]
    %v465 = vld [vmem:[%s3 + $0x34] sm:$0xf]
    %v466 = vld [vmem:[%s3 + $0x38] sm:$0xf]
    %v467 = vld [vmem:[%s3 + $0x3c] sm:$0xf]
    %v468 = vld [vmem:[%s3 + $0x40] sm:$0xf]
    %v469 = vld [vmem:[%s3 + $0x44] sm:$0xf]
    %v470 = vld [vmem:[%s3 + $0x48] sm:$0xf]
    %v471 = vld [vmem:[%s3 + $0x4c] sm:$0xf]
    %v472 = vld [vmem:[%s3 + $0x50] sm:$0xf]
    %v473 = vld [vmem:[%s3 + $0x54] sm:$0xf]
    %v474 = vld [vmem:[%s3 + $0x58] sm:$0xf]
    %v475 = vld [vmem:[%s3 + $0x5c] sm:$0xf]
    %v476 = vld [vmem:[%s3 + $0x60] sm:$0xf]
    %v477 = vld [vmem:[%s3 + $0x64] sm:$0xf]
    %v478 = vld [vmem:[%s3 + $0x68] sm:$0xf]
    %v479 = vld [vmem:[%s3 + $0x6c] sm:$0xf]
    %v480 = vld [vmem:[%s3 + $0x70] sm:$0xf]
    %v481 = vld [vmem:[%s3 + $0x74] sm:$0xf]
    %v482 = vld [vmem:[%s3 + $0x78] sm:$0xf]
    %v483 = vld [vmem:[%s3 + $0x7c] sm:$0xf]
    %v484 = vld [vmem:[%s4] sm:$0x1]
    %v486 = vlaneseq
    %v487 = vshrl.u32 %v486, 7
    %v488 = vsub.s32 0, %v487
    %v489 = vrot.slane %v484, %v488
    %v523 = vunpack.c.l.b16 %v452
    %v524 = vunpack.c.l.b16 %v453
    %v525 = vunpack.c.l.b16 %v454
    %v526 = vunpack.c.l.b16 %v455
    %v527 = vunpack.c.l.b16 %v456
    %v528 = vunpack.c.l.b16 %v457
    %v529 = vunpack.c.l.b16 %v458
    %v530 = vunpack.c.l.b16 %v459
    %v531 = vunpack.c.l.b16 %v460
    %v532 = vunpack.c.l.b16 %v461
    %v533 = vunpack.c.l.b16 %v462
    %v534 = vunpack.c.l.b16 %v463
    %v535 = vunpack.c.l.b16 %v464
    %v536 = vunpack.c.l.b16 %v465
    %v537 = vunpack.c.l.b16 %v466
    %v538 = vunpack.c.l.b16 %v467
    %v539 = vunpack.c.l.b16 %v468
    %v540 = vunpack.c.l.b16 %v469
    %v541 = vunpack.c.l.b16 %v470
    %v542 = vunpack.c.l.b16 %v471
    %v543 = vunpack.c.l.b16 %v472
    %v544 = vunpack.c.l.b16 %v473
    %v545 = vunpack.c.l.b16 %v474
    %v546 = vunpack.c.l.b16 %v475
    %v547 = vunpack.c.l.b16 %v476
    %v548 = vunpack.c.l.b16 %v477
    %v549 = vunpack.c.l.b16 %v478
    %v550 = vunpack.c.l.b16 %v479
    %v551 = vunpack.c.l.b16 %v480
    %v552 = vunpack.c.l.b16 %v481
    %v553 = vunpack.c.l.b16 %v482
    %v554 = vunpack.c.l.b16 %v483
    %v555 = vpack.c.b16 %v524, %v523
    %v556 = vpack.c.b16 %v526, %v525
    %v557 = vpack.c.b16 %v528, %v527
    %v558 = vpack.c.b16 %v530, %v529
    %v559 = vpack.c.b16 %v532, %v531
    %v560 = vpack.c.b16 %v534, %v533
    %v561 = vpack.c.b16 %v536, %v535
    %v562 = vpack.c.b16 %v538, %v537
    %v563 = vpack.c.b16 %v540, %v539
    %v564 = vpack.c.b16 %v542, %v541
    %v565 = vpack.c.b16 %v544, %v543
    %v566 = vpack.c.b16 %v546, %v545
    %v567 = vpack.c.b16 %v548, %v547
    %v568 = vpack.c.b16 %v550, %v549
    %v569 = vpack.c.b16 %v552, %v551
    %v570 = vpack.c.b16 %v554, %v553
    %587 = vmatprep.subr.bf16.mxu0 0
    %588 = vmatpush1.bf16.msra.mxu0 %v555
    %589 = vmatprep.subr.bf16.mxu0 0
    %590 = vmatpush1.bf16.msra.mxu0 %v556
    %591 = vmatprep.subr.bf16.mxu0 0
    %592 = vmatpush1.bf16.msra.mxu0 %v557
    %593 = vmatprep.subr.bf16.mxu0 0
    %594 = vmatpush1.bf16.msra.mxu0 %v558
    %595 = vmatprep.subr.bf16.mxu0 0
    %596 = vmatpush1.bf16.msra.mxu0 %v559
    %597 = vmatprep.subr.bf16.mxu0 0
    %598 = vmatpush1.bf16.msra.mxu0 %v560
    %599 = vmatprep.subr.bf16.mxu0 0
    %600 = vmatpush1.bf16.msra.mxu0 %v561
    %601 = vmatprep.subr.bf16.mxu0 0
    %602 = vmatpush1.bf16.msra.mxu0 %v562
    %603 = vmatprep.subr.bf16.mxu0 0
    %604 = vmatpush1.bf16.msra.mxu0 %v563
    %605 = vmatprep.subr.bf16.mxu0 0
    %606 = vmatpush1.bf16.msra.mxu0 %v564
    %607 = vmatprep.subr.bf16.mxu0 0
    %608 = vmatpush1.bf16.msra.mxu0 %v565
    %609 = vmatprep.subr.bf16.mxu0 0
    %610 = vmatpush1.bf16.msra.mxu0 %v566
    %611 = vmatprep.subr.bf16.mxu0 0
    %612 = vmatpush1.bf16.msra.mxu0 %v567
    %613 = vmatprep.subr.bf16.mxu0 0
    %614 = vmatpush1.bf16.msra.mxu0 %v568
    %615 = vmatprep.subr.bf16.mxu0 0
    %616 = vmatpush1.bf16.msra.mxu0 %v569
    %617 = vmatprep.subr.bf16.mxu0 0
    %618 = vmatpush1.bf16.msra.mxu0 %v570
    %619 = vmatprep.mubr.bf16.mxu0 %v451
    %620 = vmatmul.mubr.bf16.gmra.mrb[0].mxu0 %v450
    %v621 = vpop.f32.mrb[0].mxu0
    %v622 = vadd.f32 %v489, %v621
    %v623 = vpop.f32.mrb[0].mxu0
    %v624 = vpop.f32.mrb[0].mxu0
    %v625 = vpop.f32.mrb[0].mxu0
    %626 = vdwg.mxu0
    %v627 = vmax.f32 %v622, 0.0
    %v628 = vpack.c.bf16 %v627, %v627
    %v629 = vld [vmem:[%s5] sm:$0xf]
    %v630 = vld [vmem:[%s5 + $0x4] sm:$0xf]
    %v631 = vld [vmem:[%s5 + $0x8] sm:$0xf]
    %v632 = vld [vmem:[%s5 + $0xc] sm:$0xf]
    %v633 = vld [vmem:[%s5 + $0x10] sm:$0xf]
    %v634 = vld [vmem:[%s5 + $0x14] sm:$0xf]
    %v635 = vld [vmem:[%s5 + $0x18] sm:$0xf]
    %v636 = vld [vmem:[%s5 + $0x1c] sm:$0xf]
    %v637 = vld [vmem:[%s5 + $0x20] sm:$0xf]
    %v638 = vld [vmem:[%s5 + $0x24] sm:$0xf]
    %v639 = vld [vmem:[%s5 + $0x28] sm:$0xf]
    %v640 = vld [vmem:[%s5 + $0x2c] sm:$0xf]
    %v641 = vld [vmem:[%s5 + $0x30] sm:$0xf]
    %v642 = vld [vmem:[%s5 + $0x34] sm:$0xf]
    %v643 = vld [vmem:[%s5 + $0x38] sm:$0xf]
    %v644 = vld [vmem:[%s5 + $0x3c] sm:$0xf]
    %v645 = vld [vmem:[%s6] sm:$0x1]
    %v647 = vlaneseq
    %v648 = vshrl.u32 %v647, 7
    %v649 = vsub.s32 0, %v648
    %v650 = vrot.slane %v645, %v649
    %v668 = vunpack.c.l.b16 %v629
    %v669 = vunpack.c.l.b16 %v630
    %v670 = vunpack.c.l.b16 %v631
    %v671 = vunpack.c.l.b16 %v632
    %v672 = vunpack.c.l.b16 %v633
    %v673 = vunpack.c.l.b16 %v634
    %v674 = vunpack.c.l.b16 %v635
    %v675 = vunpack.c.l.b16 %v636
    %v676 = vunpack.c.l.b16 %v637
    %v677 = vunpack.c.l.b16 %v638
    %v678 = vunpack.c.l.b16 %v639
    %v679 = vunpack.c.l.b16 %v640
    %v680 = vunpack.c.l.b16 %v641
    %v681 = vunpack.c.l.b16 %v642
    %v682 = vunpack.c.l.b16 %v643
    %v683 = vunpack.c.l.b16 %v644
    %v684 = vpack.c.b16 %v669, %v668
    %v685 = vpack.c.b16 %v671, %v670
    %v686 = vpack.c.b16 %v673, %v672
    %v687 = vpack.c.b16 %v675, %v674
    %v688 = vpack.c.b16 %v677, %v676
    %v689 = vpack.c.b16 %v679, %v678
    %v690 = vpack.c.b16 %v681, %v680
    %v691 = vpack.c.b16 %v683, %v682
    %700 = vmatprep.subr.bf16.mxu0 0
    %701 = vmatpush1.bf16.msra.mxu0 %v684
    %702 = vmatprep.subr.bf16.mxu0 0
    %703 = vmatpush1.bf16.msra.mxu0 %v685
    %704 = vmatprep.subr.bf16.mxu0 0
    %705 = vmatpush1.bf16.msra.mxu0 %v686
    %706 = vmatprep.subr.bf16.mxu0 0
    %707 = vmatpush1.bf16.msra.mxu0 %v687
    %708 = vmatprep.subr.bf16.mxu0 0
    %709 = vmatpush1.bf16.msra.mxu0 %v688
    %710 = vmatprep.subr.bf16.mxu0 0
    %711 = vmatpush1.bf16.msra.mxu0 %v689
    %712 = vmatprep.subr.bf16.mxu0 0
    %713 = vmatpush1.bf16.msra.mxu0 %v690
    %714 = vmatprep.subr.bf16.mxu0 0
    %715 = vmatpush1.bf16.msra.mxu0 %v691
    %716 = vmatprep.subr.bf16.mxu0 0
    %717 = vmatpush1.bf16.msra.mxu0 0
    %718 = vmatprep.subr.bf16.mxu0 0
    %719 = vmatpush1.bf16.msra.mxu0 0
    %720 = vmatprep.subr.bf16.mxu0 0
    %721 = vmatpush1.bf16.msra.mxu0 0
    %722 = vmatprep.subr.bf16.mxu0 0
    %723 = vmatpush1.bf16.msra.mxu0 0
    %724 = vmatprep.subr.bf16.mxu0 0
    %725 = vmatpush1.bf16.msra.mxu0 0
    %726 = vmatprep.subr.bf16.mxu0 0
    %727 = vmatpush1.bf16.msra.mxu0 0
    %728 = vmatprep.subr.bf16.mxu0 0
    %729 = vmatpush1.bf16.msra.mxu0 0
    %730 = vmatprep.subr.bf16.mxu0 0
    %731 = vmatpush1.bf16.msra.mxu0 0
    %732 = vmatprep.mubr.bf16.mxu0 0
    %733 = vmatmul.mubr.bf16.gmra.mrb[0].mxu0 %v628
    %v734 = vpop.f32.mrb[0].mxu0
    %v735 = vadd.f32 %v650, %v734
    %v736 = vpop.f32.mrb[0].mxu0
    %v737 = vpop.f32.mrb[0].mxu0
    %v738 = vpop.f32.mrb[0].mxu0
    %739 = vdwg.mxu0
    %v740 = vpack.c.bf16 %v735, %v735
    %741 = vst [vmem:[%s7] sm:$0xf] %v740
    // Predicated region
    $region34: #{_lambda_.1} parent=1 // pred_check
      _
    $region35: #{_lambda_.1} parent=1 // pred_check_branch
      %743 = sbr.rel (0) target = $region37
    $region36: #{_lambda_.1} parent=1 // pred_region
      _
    $region37: #{_lambda_.1} parent=1 // pred_fallthru
      _
    // Predicated region
    $region38: #{_lambda_.1} parent=1 // pred_check
      _
    $region39: #{_lambda_.1} parent=1 // pred_check_branch
      %745 = sbr.rel (0) target = $region41
    $region40: #{_lambda_.1} parent=1 // pred_region
      _
    $region41: #{_lambda_.1} parent=1 // pred_fallthru
      _
    %746 = vsyncpa [#allocation3], 1

</llo_original>
